<compile_context>
chip_gen: v6e
topology: v6e:2x2x1
jax: 0.10.0
libtpu: 0.0.40
codegen_flags: <defaults>
</compile_context>

<pallas_src>
import functools

import jax
import jax.numpy as jnp
from jax.experimental import pallas as pl
from jax.experimental.pallas import tpu as pltpu


def _round_up(x, m):
    return (x + m - 1) // m * m


def patch_embed_kernel(p_ref, w_ref, add_ref, o_ref, *, bt, tp, dp):
    # p_ref:   (bt*tp, Kp) bf16  token rows (zero cls row + patch rows + pad rows)
    # w_ref:   (Kp, Dp)    bf16  projection weight          (grid-invariant)
    # add_ref: (tp, Dp)    f32   per-image additive table   (grid-invariant)
    # o_ref:   (bt*tp, Dp) out dtype
    proj = jnp.dot(p_ref[...], w_ref[...], preferred_element_type=jnp.float32)
    # Major-dim split reshape + broadcast add: layout-free, since the trailing
    # dims stay (tp, dp) with tp % 16 == 0 and dp % 128 == 0.
    proj = proj.reshape(bt, tp, dp) + add_ref[...]
    o_ref[...] = proj.reshape(bt * tp, dp).astype(o_ref.dtype)


def patch_embedding(x, conv_w, conv_b, cls_token, pos_embedding, patch_size,
                    *, out_dtype=jnp.bfloat16, target_rows=1024):
    """Forward pass of the PyTorch PatchEmbedding module.

    x: (B, C, H, W) float32 (NCHW, like PyTorch). Returns (B, 1+N, D) in
    `out_dtype`. Matmul operands are bf16 with f32 accumulation; pass
    out_dtype=jnp.float32 to keep an f32 result (same matmul precision, twice
    the output HBM traffic).
    """
    B, C, H, W = x.shape
    P = patch_size
    Hp, Wp = H // P, W // P
    N = Hp * Wp
    D = conv_w.shape[0]
    K = C * P * P
    T = 1 + N                          # tokens per image (cls + patches)
    Kp = _round_up(K, 128)             # lane-dense contraction dim
    Dp = _round_up(D, 128)             # lane-dense output dim
    Tp = _round_up(T, 16)              # sublane-aligned tokens/image (bf16 pack)

    # Images per grid step. Fixed MXU-friendly row tile for ANY batch size:
    # no divisor requirement on B, so no giant single-block fallback. The
    # default tile (~1024 rows) keeps blocks well under the 32 MiB scoped-VMEM
    # default on all generations for ViT-class dims (raise vmem_limit_bytes in
    # CompilerParams only if you grow target_rows past ~2-3K rows).
    Bt = max(1, min(B, -(-target_rows // Tp)))
    Bp = _round_up(B, Bt)              # batch padded to a multiple of Bt
    rows = Bt * Tp                     # row tile height (multiple of 16)
    grid = (Bp // Bt,)

    # --- glue (XLA): patch extraction + cls/token/batch/lane padding --------
    # TODO(synk): the NCHW->patch transpose is one unavoidable HBM copy while
    # keeping the PyTorch NCHW input contract; an NHWC producer would reduce
    # it to a reshape fused into the bf16 cast (plus a one-time weight-row
    # reorder), roughly halving end-to-end HBM traffic for this op.
    patches = x.reshape(B, C, Hp, P, Wp, P).transpose(0, 2, 4, 1, 3, 5)
    patches = patches.reshape(B, N, K)
    patches = jnp.pad(
        patches,
        ((0, Bp - B),        # dummy images (trimmed after the call)
         (1, Tp - T),        # one zero cls row in front + dummy token rows after
         (0, Kp - K)))       # lane pad of the contraction dim
    patches = patches.reshape(Bp * Tp, Kp).astype(jnp.bfloat16)

    # --- glue: fold weight / bias / cls / pos into two small tables ---------
    w = conv_w.reshape(D, K).T                                    # (K, D), rows (c, ph, pw)
    w = jnp.pad(w, ((0, Kp - K), (0, Dp - D))).astype(jnp.bfloat16)

    pos = pos_embedding.reshape(T, D)
    add = jnp.concatenate(
        [cls_token.reshape(1, D) + pos[:1],          # cls row: no conv bias
         pos[1:] + conv_b.reshape(1, D)], axis=0)    # patch rows: pos + bias
    add = jnp.pad(add, ((0, Tp - T), (0, Dp - D)))   # (Tp, Dp) f32, stays f32

    out_bytes = jnp.dtype(out_dtype).itemsize
    cost = pl.CostEstimate(
        flops=2 * Bp * Tp * Kp * Dp,
        transcendentals=0,
        bytes_accessed=(Bp * Tp * Kp * 2            # patches (bf16)
                        + Kp * Dp * 2               # weight  (bf16)
                        + Tp * Dp * 4               # add table (f32)
                        + Bp * Tp * Dp * out_bytes))

    kernel = functools.partial(patch_embed_kernel, bt=Bt, tp=Tp, dp=Dp)
    resident = pl.Buffered(1)   # grid-invariant operands: 2nd buffer is dead VMEM

    out = pl.pallas_call(
        kernel,
        out_shape=jax.ShapeDtypeStruct((Bp * Tp, Dp), out_dtype),
        grid_spec=pltpu.PrefetchScalarGridSpec(
            num_scalar_prefetch=0,
            grid=grid,
            in_specs=[
                pl.BlockSpec((rows, Kp), lambda i: (i, 0)),        # token rows (streamed)
                pl.BlockSpec((Kp, Dp), lambda i: (0, 0),
                             pipeline_mode=resident),              # weight (resident)
                pl.BlockSpec((Tp, Dp), lambda i: (0, 0),
                             pipeline_mode=resident),              # add table (resident)
            ],
            out_specs=pl.BlockSpec((rows, Dp), lambda i: (i, 0)),
        ),
        compiler_params=pltpu.CompilerParams(
            dimension_semantics=("parallel",)),
        cost_estimate=cost,
    )(patches, w, add)

    out = out.reshape(Bp, Tp, Dp)
    return out[:B, :T, :D]


def patch_embedding_ref(x, conv_w, conv_b, cls_token, pos_embedding, patch_size):
    """Pure-JAX reference mirroring the PyTorch module (f32 throughout)."""
    B = x.shape[0]
    y = jax.lax.conv_general_dilated(
        x, conv_w,
        window_strides=(patch_size, patch_size),
        padding="VALID",
        dimension_numbers=("NCHW", "OIHW", "NCHW"),
    ) + conv_b.reshape(1, -1, 1, 1)
    D = y.shape[1]
    y = y.reshape(B, D, -1).transpose(0, 2, 1)                    # (B, N, D)
    cls = jnp.broadcast_to(cls_token, (B, 1, D))
    y = jnp.concatenate([cls, y], axis=1)
    return y + pos_embedding


if __name__ == "__main__":
    image_size, patch_size, in_channels, embed_dim = 16, 4, 4, 32
    B = 2
    num_patches = (image_size // patch_size) ** 2  # 16

    key = jax.random.PRNGKey(0)
    k_x, k_w, k_b, k_cls, k_pos = jax.random.split(key, 5)

    x = jax.random.normal(k_x, (B, in_channels, image_size, image_size),
                          dtype=jnp.float32)
    conv_w = jax.random.normal(
        k_w, (embed_dim, in_channels, patch_size, patch_size),
        dtype=jnp.float32) * 0.05
    conv_b = jax.random.normal(k_b, (embed_dim,), dtype=jnp.float32) * 0.05
    cls_token = jax.random.normal(k_cls, (1, 1, embed_dim), dtype=jnp.float32)
    pos_embedding = jax.random.normal(
        k_pos, (1, 1 + num_patches, embed_dim), dtype=jnp.float32)

    ref = patch_embedding_ref(x, conv_w, conv_b, cls_token, pos_embedding,
                              patch_size)

    # Default (perf) path: bf16 output, f32 accumulate + f32 add in-kernel.
    out_bf16 = patch_embedding(x, conv_w, conv_b, cls_token, pos_embedding,
                               patch_size)
    out_bf16 = jax.block_until_ready(out_bf16)
    assert out_bf16.shape == (B, 1 + num_patches, embed_dim)
    assert out_bf16.dtype == jnp.bfloat16
    err = float(jnp.max(jnp.abs(out_bf16.astype(jnp.float32) - ref)))
    assert jnp.allclose(out_bf16.astype(jnp.float32), ref,
                        atol=5e-2, rtol=5e-2), err

    # f32-output path (bf16 matmul operands, f32 store).
    out_f32 = patch_embedding(x, conv_w, conv_b, cls_token, pos_embedding,
                              patch_size, out_dtype=jnp.float32)
    out_f32 = jax.block_until_ready(out_f32)
    assert out_f32.shape == (B, 1 + num_patches, embed_dim)
    assert jnp.allclose(out_f32, ref, atol=3e-2, rtol=3e-2), \
        float(jnp.max(jnp.abs(out_f32 - ref)))

    print("KERNEL_OK")
</pallas_src>

<mosaic_0001>
module attributes {stable_mosaic.version = 11 : i64} {
  func.func @patch_embed_kernel(%arg0: i32, %arg1: memref<64x128xbf16, #tpu.memory_space<vmem>>, %arg2: memref<128x128xbf16, #tpu.memory_space<vmem>>, %arg3: memref<32x128xf32, #tpu.memory_space<vmem>>, %arg4: memref<64x128xbf16, #tpu.memory_space<vmem>>) attributes {dimension_semantics = [#tpu.dimension_semantics<parallel>], iteration_bounds = array<i64: 1>, scalar_prefetch = 0 : i64, scratch_operands = 0 : i64, tpu.core_type = #tpu.core_type<tc>, window_params = [{transform_indices = @transform_0, window_bounds = array<i64: 64, 128>}, {pipeline_mode = #tpu.pipeline_mode<synchronous>, transform_indices = @transform_1, window_bounds = array<i64: 128, 128>}, {pipeline_mode = #tpu.pipeline_mode<synchronous>, transform_indices = @transform_2, window_bounds = array<i64: 32, 128>}, {transform_indices = @transform_3, window_bounds = array<i64: 64, 128>}]} {
    %c0 = arith.constant 0 : index
    %c0_0 = arith.constant 0 : index
    %0 = vector.load %arg1[%c0, %c0_0] : memref<64x128xbf16, #tpu.memory_space<vmem>>, vector<64x128xbf16>
    %c0_1 = arith.constant 0 : index
    %c0_2 = arith.constant 0 : index
    %1 = vector.load %arg2[%c0_1, %c0_2] : memref<128x128xbf16, #tpu.memory_space<vmem>>, vector<128x128xbf16>
    %cst = arith.constant dense<0.000000e+00> : vector<64x128xf32>
    %2 = tpu.matmul %0, %1, %cst {dimension_numbers = #tpu.dot_dimension_numbers<[1], [0], [0], [1], [0, 0, 1, 1], [], []>} : vector<64x128xbf16>, vector<128x128xbf16>, vector<64x128xf32> -> vector<64x128xf32>
    %3 = vector.shape_cast %2 : vector<64x128xf32> to vector<2x32x128xf32>
    %c0_3 = arith.constant 0 : index
    %c0_4 = arith.constant 0 : index
    %4 = vector.load %arg3[%c0_3, %c0_4] : memref<32x128xf32, #tpu.memory_space<vmem>>, vector<32x128xf32>
    %5 = vector.shape_cast %4 : vector<32x128xf32> to vector<1x32x128xf32>
    %6 = vector.broadcast %5 : vector<1x32x128xf32> to vector<2x32x128xf32>
    %7 = arith.addf %3, %6 : vector<2x32x128xf32>
    %8 = vector.shape_cast %7 : vector<2x32x128xf32> to vector<64x128xf32>
    %9 = arith.truncf %8 : vector<64x128xf32> to vector<64x128xbf16>
    %c0_5 = arith.constant 0 : index
    %c0_6 = arith.constant 0 : index
    %10 = vector.load %arg4[%c0_5, %c0_6] : memref<64x128xbf16, #tpu.memory_space<vmem>>, vector<64x128xbf16>
    tpu.vector_store %arg4[%c0_5, %c0_6], %9 {strides = array<i32>} : memref<64x128xbf16, #tpu.memory_space<vmem>>, vector<64x128xbf16>,
    return
  }
  func.func @transform_0(%arg0: i32) -> (i32, i32) {
    %c0_i32 = arith.constant 0 : i32
    %c0_i32_0 = arith.constant 0 : i32
    return %arg0, %c0_i32 : i32, i32
  }
  func.func @transform_1(%arg0: i32) -> (i32, i32) {
    %c0_i32 = arith.constant 0 : i32
    %c0_i32_0 = arith.constant 0 : i32
    %c0_i32_1 = arith.constant 0 : i32
    return %c0_i32, %c0_i32_0 : i32, i32
  }
  func.func @transform_2(%arg0: i32) -> (i32, i32) {
    %c0_i32 = arith.constant 0 : i32
    %c0_i32_0 = arith.constant 0 : i32
    %c0_i32_1 = arith.constant 0 : i32
    return %c0_i32, %c0_i32_0 : i32, i32
  }
  func.func @transform_3(%arg0: i32) -> (i32, i32) {
    %c0_i32 = arith.constant 0 : i32
    %c0_i32_0 = arith.constant 0 : i32
    return %arg0, %c0_i32 : i32, i32
  }
}

</mosaic_0001>

<llo_original>
// kernel: tpu_custom_call.1
$region0: #{tpu_custom_call.1}
  #allocation0 [shape = 'u32[]', space=smem, size = 0x4, offset = 0x4, fixed_abs, tag = 'smem constant byte address 0x4 - core index']
  #allocation1 [shape = 'u32[144,128]{1,0:T(1,128)}', space=vmem, size = 0x12000, scoped, tag = 'internal scratch']
  %s0 = inlined_call_operand.hbm [shape: bf16[64,128], index: 0, kind: input, shape index: {}]
  %s1 = inlined_call_operand.hbm [shape: bf16[128,128], index: 1, kind: input, shape index: {}]
  %s2 = inlined_call_operand.hbm [shape: f32[32,128], index: 2, kind: input, shape index: {}]
  %s3 = inlined_call_operand.hbm [shape: bf16[64,128], index: 3, kind: output, shape index: {}]
  %s4 = sld [smem:[#allocation0]]
  $region34: #{tpu_custom_call.1} parent=0
    _
  %s6 = ssub.s32 1, %s4
  %s7 = scalar_select 0, %s6, %s4
  $region1: #{tpu_custom_call.1} parent=0
    #allocation2 [shape = 'u8[16384]{0}', space=vmem, size = 0x4000, scoped, tag = 'input window, operand 0, single buffered']
    #allocation3 [shape = 's32[1]{0}', space=sflag, size = 0x4, scoped, tag = 'scoped memory for tpu_custom_call.1']
    #allocation4 [shape = 's32[1]{0}', space=sflag, size = 0x4, scoped, tag = 'scoped memory for tpu_custom_call.1']
    #allocation5 [shape = 'u8[32768]{0}', space=vmem, size = 0x8000, scoped, tag = 'input window, operand 1, single buffered']
    #allocation6 [shape = 's32[1]{0}', space=sflag, size = 0x4, scoped, tag = 'scoped memory for tpu_custom_call.1']
    #allocation7 [shape = 'u8[16384]{0}', space=vmem, size = 0x4000, scoped, tag = 'input window, operand 2, single buffered']
    #allocation8 [shape = 'u8[16384]{0}', space=vmem, size = 0x4000, scoped, tag = 'output window, operand 0, single buffered']
    %8 = vsyncpa [#allocation3], 0
    %9 = vsyncpa [#allocation6], 0
    %10 = vsyncpa [#allocation4], 0
    // Predicated region
    $region2: #{tpu_custom_call.1} parent=1 // pred_check
      _
    $region3: #{tpu_custom_call.1} parent=1 // pred_check_branch
      %12 = sbr.rel (0) target = $region5
    $region4: #{tpu_custom_call.1} parent=1 // pred_region
      %s14 = ssub.s32 512, 512
      %15 = vsyncadd [#allocation3], %s14
      %s16 = sshll.u32 [#allocation2], 4
      %s17 = int_to_ptr.vmem [resolvable:$true] %s16
      %22 = dma.hbm_to_vmem [thread:$0]  %s0, 512, %s17, [#allocation3], 64, 64, 4
    $region5: #{tpu_custom_call.1} parent=1 // pred_fallthru
      _
    // Predicated region
    $region6: #{tpu_custom_call.1} parent=1 // pred_check
      _
    $region7: #{tpu_custom_call.1} parent=1 // pred_check_branch
      %24 = sbr.rel (0) target = $region9
    $region8: #{tpu_custom_call.1} parent=1 // pred_region
      %s26 = ssub.s32 1024, 1024
      %27 = vsyncadd [#allocation6], %s26
      %s28 = sshll.u32 [#allocation5], 4
      %s29 = int_to_ptr.vmem [resolvable:$true] %s28
      %34 = dma.hbm_to_vmem [thread:$0]  %s1, 1024, %s29, [#allocation6], 64, 64, 4
    $region9: #{tpu_custom_call.1} parent=1 // pred_fallthru
      _
    // Predicated region
    $region10: #{tpu_custom_call.1} parent=1 // pred_check
      _
    $region11: #{tpu_custom_call.1} parent=1 // pred_check_branch
      %36 = sbr.rel (0) target = $region13
    $region12: #{tpu_custom_call.1} parent=1 // pred_region
      %s38 = ssub.s32 512, 512
      %39 = vsyncadd [#allocation6], %s38
      %s40 = sshll.u32 [#allocation7], 4
      %s41 = int_to_ptr.vmem [resolvable:$true] %s40
      %46 = dma.hbm_to_vmem [thread:$0]  %s2, 512, %s41, [#allocation6], 128, 128, 8
    $region13: #{tpu_custom_call.1} parent=1 // pred_fallthru
      _
    // Predicated region
    $region14: #{tpu_custom_call.1} parent=1 // pred_check
      _
    $region15: #{tpu_custom_call.1} parent=1 // pred_check_branch
      %48 = sbr.rel (0) target = $region17
    $region16: #{tpu_custom_call.1} parent=1 // pred_region
      %49 = dma.done [#allocation3], 512
    $region17: #{tpu_custom_call.1} parent=1 // pred_fallthru
      _
    // Predicated region
    $region18: #{tpu_custom_call.1} parent=1 // pred_check
      _
    $region19: #{tpu_custom_call.1} parent=1 // pred_check_branch
      %51 = sbr.rel (0) target = $region21
    $region20: #{tpu_custom_call.1} parent=1 // pred_region
      %52 = dma.done [#allocation6], 1024
    $region21: #{tpu_custom_call.1} parent=1 // pred_fallthru
      _
    // Predicated region
    $region22: #{tpu_custom_call.1} parent=1 // pred_check
      _
    $region23: #{tpu_custom_call.1} parent=1 // pred_check_branch
      %54 = sbr.rel (0) target = $region25
    $region24: #{tpu_custom_call.1} parent=1 // pred_region
      %55 = dma.done [#allocation6], 512
    $region25: #{tpu_custom_call.1} parent=1 // pred_fallthru
      _
    %v57 = vld [vmem:[#allocation2] sm:$0xf]
    %v58 = vld [vmem:[#allocation2 + $0x4] sm:$0xf]
    %v59 = vld [vmem:[#allocation2 + $0x8] sm:$0xf]
    %v60 = vld [vmem:[#allocation2 + $0xc] sm:$0xf]
    %v61 = vld [vmem:[#allocation2 + $0x10] sm:$0xf]
    %v62 = vld [vmem:[#allocation2 + $0x14] sm:$0xf]
    %v63 = vld [vmem:[#allocation2 + $0x18] sm:$0xf]
    %v64 = vld [vmem:[#allocation2 + $0x1c] sm:$0xf]
    %v65 = vld [vmem:[#allocation5] sm:$0xf]
    %v66 = vld [vmem:[#allocation5 + $0x4] sm:$0xf]
    %v67 = vld [vmem:[#allocation5 + $0x8] sm:$0xf]
    %v68 = vld [vmem:[#allocation5 + $0xc] sm:$0xf]
    %v69 = vld [vmem:[#allocation5 + $0x10] sm:$0xf]
    %v70 = vld [vmem:[#allocation5 + $0x14] sm:$0xf]
    %v71 = vld [vmem:[#allocation5 + $0x18] sm:$0xf]
    %v72 = vld [vmem:[#allocation5 + $0x1c] sm:$0xf]
    %v73 = vld [vmem:[#allocation5 + $0x20] sm:$0xf]
    %v74 = vld [vmem:[#allocation5 + $0x24] sm:$0xf]
    %v75 = vld [vmem:[#allocation5 + $0x28] sm:$0xf]
    %v76 = vld [vmem:[#allocation5 + $0x2c] sm:$0xf]
    %v77 = vld [vmem:[#allocation5 + $0x30] sm:$0xf]
    %v78 = vld [vmem:[#allocation5 + $0x34] sm:$0xf]
    %v79 = vld [vmem:[#allocation5 + $0x38] sm:$0xf]
    %v80 = vld [vmem:[#allocation5 + $0x3c] sm:$0xf]
    %v89 = vunpack.c.l.b16 %v57
    %v90 = vunpack.c.l.b16 %v58
    %v91 = vunpack.c.l.b16 %v59
    %v92 = vunpack.c.l.b16 %v60
    %v93 = vunpack.c.l.b16 %v61
    %v94 = vunpack.c.l.b16 %v62
    %v95 = vunpack.c.l.b16 %v63
    %v96 = vunpack.c.l.b16 %v64
    %v97 = vpack.c.b16 %v90, %v89
    %v98 = vpack.c.b16 %v92, %v91
    %v99 = vpack.c.b16 %v94, %v93
    %v100 = vpack.c.b16 %v96, %v95
    %v121 = vunpack.c.l.b16 %v65
    %v122 = vunpack.c.l.b16 %v66
    %v123 = vunpack.c.l.b16 %v67
    %v124 = vunpack.c.l.b16 %v68
    %v125 = vunpack.c.l.b16 %v69
    %v126 = vunpack.c.l.b16 %v70
    %v127 = vunpack.c.l.b16 %v71
    %v128 = vunpack.c.l.b16 %v72
    %v129 = vunpack.c.l.b16 %v73
    %v130 = vunpack.c.l.b16 %v74
    %v131 = vunpack.c.l.b16 %v75
    %v132 = vunpack.c.l.b16 %v76
    %v133 = vunpack.c.l.b16 %v77
    %v134 = vunpack.c.l.b16 %v78
    %v135 = vunpack.c.l.b16 %v79
    %v136 = vunpack.c.l.b16 %v80
    %v137 = vpack.c.b16 %v122, %v121
    %v138 = vpack.c.b16 %v124, %v123
    %v139 = vpack.c.b16 %v126, %v125
    %v140 = vpack.c.b16 %v128, %v127
    %v141 = vpack.c.b16 %v130, %v129
    %v142 = vpack.c.b16 %v132, %v131
    %v143 = vpack.c.b16 %v134, %v133
    %v144 = vpack.c.b16 %v136, %v135
    %153 = vmatprep.subr.bf16.mxu0 0
    %154 = vmatpush1.bf16.msra.mxu0 %v144
    %155 = vmatprep.subr.bf16.mxu0 0
    %156 = vmatpush1.bf16.msra.mxu0 %v143
    %157 = vmatprep.subr.bf16.mxu0 0
    %158 = vmatpush1.bf16.msra.mxu0 %v142
    %159 = vmatprep.subr.bf16.mxu0 0
    %160 = vmatpush1.bf16.msra.mxu0 %v141
    %161 = vmatprep.subr.bf16.mxu0 0
    %162 = vmatpush1.bf16.msra.mxu0 %v140
    %163 = vmatprep.subr.bf16.mxu0 0
    %164 = vmatpush1.bf16.msra.mxu0 %v139
    %165 = vmatprep.subr.bf16.mxu0 0
    %166 = vmatpush1.bf16.msra.mxu0 %v138
    %167 = vmatprep.subr.bf16.mxu0 0
    %168 = vmatpush1.bf16.msra.mxu0 %v137
    %169 = vmatprep.subr.bf16.mxu0 0
    %170 = vmatpush2.bf16.msra.mxu0 0
    %171 = vmatprep.subr.bf16.mxu0 0
    %172 = vmatpush2.bf16.msra.mxu0 0
    %173 = vmatprep.subr.bf16.mxu0 0
    %174 = vmatpush2.bf16.msra.mxu0 0
    %175 = vmatprep.subr.bf16.mxu0 0
    %176 = vmatpush2.bf16.msra.mxu0 0
    %177 = vmatprep.subr.bf16.mxu0 0
    %178 = vmatpush2.bf16.msra.mxu0 0
    %179 = vmatprep.subr.bf16.mxu0 0
    %180 = vmatpush2.bf16.msra.mxu0 0
    %181 = vmatprep.subr.bf16.mxu0 0
    %182 = vmatpush2.bf16.msra.mxu0 0
    %183 = vmatprep.subr.bf16.mxu0 0
    %184 = vmatpush2.bf16.msra.mxu0 0
    %185 = vmatprep.mubr.bf16.mxu0 0
    %186 = vmatmul.mubr.bf16.gmra.mxu0 %v97
    %v187 = vpop.f32.mrf.mxu0
    %v188 = vadd.f32 0.0, %v187
    %v189 = vpop.f32.mrf.mxu0
    %v190 = vpop.f32.mrf.mxu0
    %v191 = vadd.f32 0.0, %v190
    %v192 = vpop.f32.mrf.mxu0
    %193 = vmatprep.mubr.bf16.mxu0 0
    %194 = vmatmul.mubr.bf16.gmra.mxu0 %v98
    %v195 = vpop.f32.mrf.mxu0
    %v196 = vadd.f32 0.0, %v195
    %v197 = vpop.f32.mrf.mxu0
    %v198 = vpop.f32.mrf.mxu0
    %v199 = vadd.f32 0.0, %v198
    %v200 = vpop.f32.mrf.mxu0
    %201 = vmatprep.mubr.bf16.mxu0 0
    %202 = vmatmul.mubr.bf16.gmra.mxu0 %v99
    %v203 = vpop.f32.mrf.mxu0
    %v204 = vadd.f32 0.0, %v203
    %v205 = vpop.f32.mrf.mxu0
    %v206 = vpop.f32.mrf.mxu0
    %v207 = vadd.f32 0.0, %v206
    %v208 = vpop.f32.mrf.mxu0
    %209 = vmatprep.mubr.bf16.mxu0 0
    %210 = vmatmul.mubr.bf16.gmra.mxu0 %v100
    %v211 = vpop.f32.mrf.mxu0
    %v212 = vadd.f32 0.0, %v211
    %v213 = vpop.f32.mrf.mxu0
    %v214 = vpop.f32.mrf.mxu0
    %v215 = vadd.f32 0.0, %v214
    %v216 = vpop.f32.mrf.mxu0
    %217 = vdwg.mxu0
    %v218 = vld [vmem:[#allocation7] sm:$0xff]
    %v219 = vld [vmem:[#allocation7 + $0x8] sm:$0xff]
    %v220 = vld [vmem:[#allocation7 + $0x10] sm:$0xff]
    %v221 = vld [vmem:[#allocation7 + $0x18] sm:$0xff]
    %v222 = vadd.f32 %v188, %v218
    %v223 = vadd.f32 %v191, %v219
    %v224 = vadd.f32 %v196, %v220
    %v225 = vadd.f32 %v199, %v221
    %v226 = vadd.f32 %v204, %v218
    %v227 = vadd.f32 %v207, %v219
    %v228 = vadd.f32 %v212, %v220
    %v229 = vadd.f32 %v215, %v221
    %v230 = vpack.c.bf16 %v223, %v222
    %v231 = vpack.c.bf16 %v225, %v224
    %v232 = vpack.c.bf16 %v227, %v226
    %v233 = vpack.c.bf16 %v229, %v228
    %v238 = vunpack.c.l.b16 %v230
    %v239 = vunpack.c.h.b16 %v230
    %v240 = vunpack.c.l.b16 %v231
    %v241 = vunpack.c.h.b16 %v231
    %v242 = vunpack.c.l.b16 %v232
    %v243 = vunpack.c.h.b16 %v232
    %v244 = vunpack.c.l.b16 %v233
    %v245 = vunpack.c.h.b16 %v233
    %v246 = vpack.c.b16 %v238, %v238
    %v247 = vpack.c.b16 %v239, %v239
    %v248 = vpack.c.b16 %v240, %v240
    %v249 = vpack.c.b16 %v241, %v241
    %v250 = vpack.c.b16 %v242, %v242
    %v251 = vpack.c.b16 %v243, %v243
    %v252 = vpack.c.b16 %v244, %v244
    %v253 = vpack.c.b16 %v245, %v245
    %262 = vst [vmem:[#allocation8] sm:$0xf] %v246
    %263 = vst [vmem:[#allocation8 + $0x4] sm:$0xf] %v247
    %264 = vst [vmem:[#allocation8 + $0x8] sm:$0xf] %v248
    %265 = vst [vmem:[#allocation8 + $0xc] sm:$0xf] %v249
    %266 = vst [vmem:[#allocation8 + $0x10] sm:$0xf] %v250
    %267 = vst [vmem:[#allocation8 + $0x14] sm:$0xf] %v251
    %268 = vst [vmem:[#allocation8 + $0x18] sm:$0xf] %v252
    %269 = vst [vmem:[#allocation8 + $0x1c] sm:$0xf] %v253
    // Predicated region
    $region26: #{tpu_custom_call.1} parent=1 // pred_check
      _
    $region27: #{tpu_custom_call.1} parent=1 // pred_check_branch
      %271 = sbr.rel (0) target = $region29
    $region28: #{tpu_custom_call.1} parent=1 // pred_region
      %s273 = ssub.s32 512, 512
      %274 = vsyncadd [#allocation4], %s273
      %s275 = sshll.u32 [#allocation8], 4
      %s276 = int_to_ptr.vmem [resolvable:$true] %s275
      %281 = dma.vmem_to_hbm [thread:$0]  %s276, 512, %s3, [#allocation4], 64, 64, 4
    $region29: #{tpu_custom_call.1} parent=1 // pred_fallthru
      _
    // Predicated region
    $region30: #{tpu_custom_call.1} parent=1 // pred_check
      _
    $region31: #{tpu_custom_call.1} parent=1 // pred_check_branch
      %283 = sbr.rel (0) target = $region33
    $region32: #{tpu_custom_call.1} parent=1 // pred_region
      %284 = dma.done [#allocation4], 512
    $region33: #{tpu_custom_call.1} parent=1 // pred_fallthru
      _
    %285 = vsyncpa [#allocation3], 1
    %286 = vsyncpa [#allocation6], 1
    %287 = vsyncpa [#allocation4], 1

</llo_original>
